<compile_context>
chip_gen: v5e
topology: v5e:2x2
jax: 0.10.0
libtpu: 0.0.40
codegen_flags: <defaults>
</compile_context>

<pallas_src>
import jax
import jax.numpy as jnp
import numpy as np
from jax.experimental import pallas as pl
from jax.experimental.pallas import tpu as pltpu


def _lama_actor_kernel(x_ref,            # (b_tile * ln, fd)
                       w1_ref, b1_ref,   # (fd, H1), (1, H1)
                       w2_ref, b2_ref,   # (H1, H),  (1, H)
                       w3_ref, b3_ref,   # (4H, H),  (1, H)
                       w4_ref, b4_ref,   # (H, A),   (1, A)
                       out_ref):         # (b_tile, A)
    rows = x_ref.shape[0]
    b_tile = out_ref.shape[0]
    ln = rows // b_tile
    H = w2_ref.shape[1]

    x = x_ref[...]                                                  # (B*ln, fd)

    # feature_net: Linear -> ReLU -> Linear -> ReLU over all rows of the tile.
    h = jnp.maximum(
        jnp.dot(x, w1_ref[...], preferred_element_type=jnp.float32)
        + b1_ref[...], 0.0)                                         # (B*ln, H1)
    h = jnp.maximum(
        jnp.dot(h, w2_ref[...], preferred_element_type=jnp.float32)
        + b2_ref[...], 0.0)                                         # (B*ln, H)

    # Per-sequence pooling (ln is a full sublane group per batch element).
    h3 = h.reshape(b_tile, ln, H)
    x_avg = jnp.mean(h3, axis=1)                                    # (B, H)
    x_max = jnp.max(h3, axis=1)                                     # (B, H)
    x_last = h3[:, ln - 1, :]                                       # (B, H)
    # x_attn == x_avg bit-exactly (softmax over a size-1 axis is 1.0), so the
    # attn conv/softmax branch is not computed.
    feat = jnp.concatenate([x_last, x_avg, x_max, x_avg], axis=-1)  # (B, 4H)

    # feature_net2: Linear -> ReLU (single fused dot over the 4H concat).
    f2 = jnp.maximum(
        jnp.dot(feat, w3_ref[...], preferred_element_type=jnp.float32)
        + b3_ref[...], 0.0)                                         # (B, H)

    # policy_net: Linear -> Tanh
    out = jnp.tanh(
        jnp.dot(f2, w4_ref[...], preferred_element_type=jnp.float32)
        + b4_ref[...])                                              # (B, A)
    out_ref[...] = out.astype(out_ref.dtype)


def _choose_batch_tile(bs, ln, target_rows=256):
    """Pick a batch tile so b_tile * ln ~= target_rows (fills the MXU M dim)."""
    b_tile = max(1, target_rows // max(ln, 1))
    if b_tile >= bs:
        return bs, 1                                  # single grid step
    b_tile = min(((b_tile + 7) // 8) * 8, bs)         # keep sublane blocks 8-aligned
    if b_tile >= bs:
        return bs, 1
    n_tiles = -(-bs // b_tile)
    return b_tile, n_tiles


def lama_actor_forward(states, params, *, target_rows=256):
    """Pallas forward pass. states: (bs, ln, fd) or (bs, fd). Returns (bs, A)."""
    if states.ndim < 3:
        states = states[:, None, :]
    states = states.astype(jnp.float32)
    bs, ln, fd = states.shape
    # wa / ba (attn conv) are intentionally unused: softmax(dim of size 1) == 1.
    w1, b1, w2, b2, wa, ba, w3, b3, w4, b4 = params
    H1 = w1.shape[1]
    H = w2.shape[1]
    A = w4.shape[1]

    b_tile, n_tiles = _choose_batch_tile(bs, ln, target_rows)
    bs_pad = b_tile * n_tiles
    if bs_pad != bs:
        states = jnp.concatenate(
            [states, jnp.zeros((bs_pad - bs, ln, fd), states.dtype)], axis=0)
    x2d = states.reshape(bs_pad * ln, fd)             # lane-dense 2D input

    def full_spec(shape):
        rank = len(shape)
        return pl.BlockSpec(shape, lambda i, _r=rank: (0,) * _r)

    grid_spec = pltpu.PrefetchScalarGridSpec(
        num_scalar_prefetch=0,
        grid=(n_tiles,),
        in_specs=[
            pl.BlockSpec((b_tile * ln, fd), lambda i: (i, 0)),
            full_spec(w1.shape), full_spec(b1.shape),
            full_spec(w2.shape), full_spec(b2.shape),
            full_spec(w3.shape), full_spec(b3.shape),
            full_spec(w4.shape), full_spec(b4.shape),
        ],
        out_specs=pl.BlockSpec((b_tile, A), lambda i: (i, 0)),
    )

    flops = (2 * bs_pad * ln * (fd * H1 + H1 * H)
             + 2 * bs_pad * (4 * H * H + H * A))
    bytes_accessed = 4 * (bs_pad * ln * fd + bs_pad * A
                          + fd * H1 + H1 + H1 * H + H
                          + 4 * H * H + H + H * A + A)

    out = pl.pallas_call(
        _lama_actor_kernel,
        out_shape=jax.ShapeDtypeStruct((bs_pad, A), jnp.float32),
        grid_spec=grid_spec,
        compiler_params=pltpu.CompilerParams(
            dimension_semantics=("parallel",)),
        cost_estimate=pl.CostEstimate(
            flops=flops,
            transcendentals=bs_pad * A,
            bytes_accessed=bytes_accessed),
    )(x2d, w1, b1, w2, b2, w3, b3, w4, b4)
    return out[:bs]


def init_params(key, fd, hiddens, action_size):
    """Deterministic synthetic init (Kaiming-ish for inner layers, small for heads)."""
    H1, H = hiddens
    ks = jax.random.split(key, 6)

    def lin(k, fan_in, fan_out, scale):
        return jax.random.normal(k, (fan_in, fan_out), jnp.float32) * scale

    w1 = lin(ks[0], fd, H1, (2.0 / fd) ** 0.5)
    b1 = jnp.zeros((1, H1), jnp.float32)
    w2 = lin(ks[1], H1, H, (2.0 / H1) ** 0.5)
    b2 = jnp.zeros((1, H), jnp.float32)
    wa = jax.random.normal(ks[2], (H, 1), jnp.float32) * 3e-3      # Conv1d(H->1, k=1)
    ba = jnp.full((1, 1), 1e-3, jnp.float32)
    w3 = lin(ks[3], 4 * H, H, (2.0 / (4 * H)) ** 0.5)
    b3 = jnp.zeros((1, H), jnp.float32)
    w4 = jax.random.normal(ks[4], (H, action_size), jnp.float32) * 3e-3
    b4 = jnp.zeros((1, action_size), jnp.float32)
    return (w1, b1, w2, b2, wa, ba, w3, b3, w4, b4)


def reference_forward(states, params):
    """Pure-JAX reference reproducing the torch forward literally (incl. attn)."""
    if states.ndim < 3:
        states = states[:, None, :]
    bs, ln, fd = states.shape
    w1, b1, w2, b2, wa, ba, w3, b3, w4, b4 = params
    x = states.reshape(-1, fd)
    x = jax.nn.relu(x @ w1 + b1)
    x = jax.nn.relu(x @ w2 + b2)
    x = x.reshape(bs, ln, -1)
    # torch: x_a = x.transpose(1,2) -> (bs, H, ln); Conv1d(H->1,k=1) -> (bs,1,ln);
    # Softmax(dim=1) over the size-1 channel axis -> identically 1.0.
    a = jnp.einsum('blh,ho->bol', x, wa) + ba[..., None]           # (bs, 1, ln)
    attn_w = jax.nn.softmax(a, axis=1)                             # == 1.0
    x_attn = jnp.mean(jnp.swapaxes(attn_w * jnp.swapaxes(x, 1, 2), 1, 2),
                      axis=1, keepdims=True)
    x_avg = jnp.mean(x, axis=1, keepdims=True)
    x_max = jnp.max(x, axis=1, keepdims=True)
    x_last = x[:, -1:, :]
    cat = jnp.concatenate([x_last, x_avg, x_max, x_attn], axis=1).reshape(bs, -1)
    f2 = jax.nn.relu(cat @ w3 + b3)
    return jnp.tanh(f2 @ w4 + b4)


if __name__ == "__main__":
    bs, ln, fd = 2, 8, 16
    hiddens = [32, 32]
    action_size = 4

    key = jax.random.PRNGKey(0)
    k_states, k_params = jax.random.split(key)
    states = jax.random.normal(k_states, (bs, ln, fd), jnp.float32)
    params = init_params(k_params, fd, hiddens, action_size)

    out = lama_actor_forward(states, params)
    out = jax.block_until_ready(out)

    ref = reference_forward(states, params)
    assert out.shape == (bs, action_size)
    np.testing.assert_allclose(np.asarray(out), np.asarray(ref), atol=1e-5, rtol=1e-5)

    print("KERNEL_OK")
</pallas_src>

<mosaic_0001>
module attributes {stable_mosaic.version = 11 : i64} {
  func.func @_lama_actor_kernel(%arg0: i32, %arg1: memref<16x16xf32, #tpu.memory_space<vmem>>, %arg2: memref<16x32xf32, #tpu.memory_space<vmem>>, %arg3: memref<1x32xf32, #tpu.memory_space<vmem>>, %arg4: memref<32x32xf32, #tpu.memory_space<vmem>>, %arg5: memref<1x32xf32, #tpu.memory_space<vmem>>, %arg6: memref<128x32xf32, #tpu.memory_space<vmem>>, %arg7: memref<1x32xf32, #tpu.memory_space<vmem>>, %arg8: memref<32x4xf32, #tpu.memory_space<vmem>>, %arg9: memref<1x4xf32, #tpu.memory_space<vmem>>, %arg10: memref<2x4xf32, #tpu.memory_space<vmem>>) attributes {dimension_semantics = [#tpu.dimension_semantics<parallel>], iteration_bounds = array<i64: 1>, scalar_prefetch = 0 : i64, scratch_operands = 0 : i64, tpu.core_type = #tpu.core_type<tc>, window_params = [{transform_indices = @transform_0, window_bounds = array<i64: 16, 16>}, {pipeline_mode = #tpu.pipeline_mode<synchronous>, transform_indices = @transform_1, window_bounds = array<i64: 16, 32>}, {pipeline_mode = #tpu.pipeline_mode<synchronous>, transform_indices = @transform_2, window_bounds = array<i64: 1, 32>}, {pipeline_mode = #tpu.pipeline_mode<synchronous>, transform_indices = @transform_3, window_bounds = array<i64: 32, 32>}, {pipeline_mode = #tpu.pipeline_mode<synchronous>, transform_indices = @transform_4, window_bounds = array<i64: 1, 32>}, {pipeline_mode = #tpu.pipeline_mode<synchronous>, transform_indices = @transform_5, window_bounds = array<i64: 128, 32>}, {pipeline_mode = #tpu.pipeline_mode<synchronous>, transform_indices = @transform_6, window_bounds = array<i64: 1, 32>}, {pipeline_mode = #tpu.pipeline_mode<synchronous>, transform_indices = @transform_7, window_bounds = array<i64: 32, 4>}, {pipeline_mode = #tpu.pipeline_mode<synchronous>, transform_indices = @transform_8, window_bounds = array<i64: 1, 4>}, {transform_indices = @transform_9, window_bounds = array<i64: 2, 4>}]} {
    %c0 = arith.constant 0 : index
    %c0_0 = arith.constant 0 : index
    %0 = vector.load %arg1[%c0, %c0_0] : memref<16x16xf32, #tpu.memory_space<vmem>>, vector<16x16xf32>
    %c0_1 = arith.constant 0 : index
    %c0_2 = arith.constant 0 : index
    %1 = vector.load %arg2[%c0_1, %c0_2] : memref<16x32xf32, #tpu.memory_space<vmem>>, vector<16x32xf32>
    %cst = arith.constant dense<0.000000e+00> : vector<16x32xf32>
    %2 = tpu.matmul %0, %1, %cst {dimension_numbers = #tpu.dot_dimension_numbers<[1], [0], [0], [1], [0, 0, 1, 1], [], []>} : vector<16x16xf32>, vector<16x32xf32>, vector<16x32xf32> -> vector<16x32xf32>
    %c0_3 = arith.constant 0 : index
    %c0_4 = arith.constant 0 : index
    %3 = vector.load %arg3[%c0_3, %c0_4] : memref<1x32xf32, #tpu.memory_space<vmem>>, vector<1x32xf32>
    %4 = vector.broadcast %3 : vector<1x32xf32> to vector<16x32xf32>
    %5 = arith.addf %2, %4 : vector<16x32xf32>
    %cst_5 = arith.constant 0.000000e+00 : f32
    %6 = vector.broadcast %cst_5 : f32 to vector<16x32xf32>
    %7 = arith.maximumf %5, %6 : vector<16x32xf32>
    %c0_6 = arith.constant 0 : index
    %c0_7 = arith.constant 0 : index
    %8 = vector.load %arg4[%c0_6, %c0_7] : memref<32x32xf32, #tpu.memory_space<vmem>>, vector<32x32xf32>
    %cst_8 = arith.constant dense<0.000000e+00> : vector<16x32xf32>
    %9 = tpu.matmul %7, %8, %cst_8 {dimension_numbers = #tpu.dot_dimension_numbers<[1], [0], [0], [1], [0, 0, 1, 1], [], []>} : vector<16x32xf32>, vector<32x32xf32>, vector<16x32xf32> -> vector<16x32xf32>
    %c0_9 = arith.constant 0 : index
    %c0_10 = arith.constant 0 : index
    %10 = vector.load %arg5[%c0_9, %c0_10] : memref<1x32xf32, #tpu.memory_space<vmem>>, vector<1x32xf32>
    %11 = vector.broadcast %10 : vector<1x32xf32> to vector<16x32xf32>
    %12 = arith.addf %9, %11 : vector<16x32xf32>
    %cst_11 = arith.constant 0.000000e+00 : f32
    %13 = vector.broadcast %cst_11 : f32 to vector<16x32xf32>
    %14 = arith.maximumf %12, %13 : vector<16x32xf32>
    %15 = vector.shape_cast %14 : vector<16x32xf32> to vector<2x8x32xf32>
    %cst_12 = arith.constant dense<0.000000e+00> : vector<2x32xf32>
    %16 = vector.multi_reduction <add>, %15, %cst_12 [1] : vector<2x8x32xf32> to vector<2x32xf32>
    %cst_13 = arith.constant 8.000000e+00 : f32
    %17 = vector.broadcast %cst_13 : f32 to vector<2x32xf32>
    %18 = arith.divf %16, %17 : vector<2x32xf32>
    %cst_14 = arith.constant dense<0xFF800000> : vector<2x32xf32>
    %19 = vector.multi_reduction <maximumf>, %15, %cst_14 [1] : vector<2x8x32xf32> to vector<2x32xf32>
    %20 = vector.extract_strided_slice %15 {offsets = [0, 7, 0], sizes = [2, 1, 32], strides = [1, 1, 1]} : vector<2x8x32xf32> to vector<2x1x32xf32>
    %21 = vector.shape_cast %20 : vector<2x1x32xf32> to vector<2x32xf32>
    %22 = tpu.concatenate %21, %18, %19, %18 in 1 : vector<2x32xf32>, vector<2x32xf32>, vector<2x32xf32>, vector<2x32xf32> -> vector<2x128xf32>
    %c0_15 = arith.constant 0 : index
    %c0_16 = arith.constant 0 : index
    %23 = vector.load %arg6[%c0_15, %c0_16] : memref<128x32xf32, #tpu.memory_space<vmem>>, vector<128x32xf32>
    %cst_17 = arith.constant dense<0.000000e+00> : vector<2x32xf32>
    %24 = tpu.matmul %22, %23, %cst_17 {dimension_numbers = #tpu.dot_dimension_numbers<[1], [0], [0], [1], [0, 0, 1, 1], [], []>} : vector<2x128xf32>, vector<128x32xf32>, vector<2x32xf32> -> vector<2x32xf32>
    %c0_18 = arith.constant 0 : index
    %c0_19 = arith.constant 0 : index
    %25 = vector.load %arg7[%c0_18, %c0_19] : memref<1x32xf32, #tpu.memory_space<vmem>>, vector<1x32xf32>
    %26 = vector.broadcast %25 : vector<1x32xf32> to vector<2x32xf32>
    %27 = arith.addf %24, %26 : vector<2x32xf32>
    %cst_20 = arith.constant 0.000000e+00 : f32
    %28 = vector.broadcast %cst_20 : f32 to vector<2x32xf32>
    %29 = arith.maximumf %27, %28 : vector<2x32xf32>
    %c0_21 = arith.constant 0 : index
    %c0_22 = arith.constant 0 : index
    %30 = vector.load %arg8[%c0_21, %c0_22] : memref<32x4xf32, #tpu.memory_space<vmem>>, vector<32x4xf32>
    %cst_23 = arith.constant dense<0.000000e+00> : vector<2x4xf32>
    %31 = tpu.matmul %29, %30, %cst_23 {dimension_numbers = #tpu.dot_dimension_numbers<[1], [0], [0], [1], [0, 0, 1, 1], [], []>} : vector<2x32xf32>, vector<32x4xf32>, vector<2x4xf32> -> vector<2x4xf32>
    %c0_24 = arith.constant 0 : index
    %c0_25 = arith.constant 0 : index
    %32 = vector.load %arg9[%c0_24, %c0_25] : memref<1x4xf32, #tpu.memory_space<vmem>>, vector<1x4xf32>
    %33 = vector.broadcast %32 : vector<1x4xf32> to vector<2x4xf32>
    %34 = arith.addf %31, %33 : vector<2x4xf32>
    %35 = math.tanh %34 : vector<2x4xf32>
    %c0_26 = arith.constant 0 : index
    %c0_27 = arith.constant 0 : index
    %36 = vector.load %arg10[%c0_26, %c0_27] : memref<2x4xf32, #tpu.memory_space<vmem>>, vector<2x4xf32>
    tpu.vector_store %arg10[%c0_26, %c0_27], %35 {strides = array<i32>} : memref<2x4xf32, #tpu.memory_space<vmem>>, vector<2x4xf32>,
    return
  }
  func.func @transform_0(%arg0: i32) -> (i32, i32) {
    %c0_i32 = arith.constant 0 : i32
    %c0_i32_0 = arith.constant 0 : i32
    return %arg0, %c0_i32 : i32, i32
  }
  func.func @transform_1(%arg0: i32) -> (i32, i32) {
    %c0_i32 = arith.constant 0 : i32
    %c0_i32_0 = arith.constant 0 : i32
    %c0_i32_1 = arith.constant 0 : i32
    return %c0_i32, %c0_i32_0 : i32, i32
  }
  func.func @transform_2(%arg0: i32) -> (i32, i32) {
    %c0_i32 = arith.constant 0 : i32
    %c0_i32_0 = arith.constant 0 : i32
    %c0_i32_1 = arith.constant 0 : i32
    return %c0_i32, %c0_i32_0 : i32, i32
  }
  func.func @transform_3(%arg0: i32) -> (i32, i32) {
    %c0_i32 = arith.constant 0 : i32
    %c0_i32_0 = arith.constant 0 : i32
    %c0_i32_1 = arith.constant 0 : i32
    return %c0_i32, %c0_i32_0 : i32, i32
  }
  func.func @transform_4(%arg0: i32) -> (i32, i32) {
    %c0_i32 = arith.constant 0 : i32
    %c0_i32_0 = arith.constant 0 : i32
    %c0_i32_1 = arith.constant 0 : i32
    return %c0_i32, %c0_i32_0 : i32, i32
  }
  func.func @transform_5(%arg0: i32) -> (i32, i32) {
    %c0_i32 = arith.constant 0 : i32
    %c0_i32_0 = arith.constant 0 : i32
    %c0_i32_1 = arith.constant 0 : i32
    return %c0_i32, %c0_i32_0 : i32, i32
  }
  func.func @transform_6(%arg0: i32) -> (i32, i32) {
    %c0_i32 = arith.constant 0 : i32
    %c0_i32_0 = arith.constant 0 : i32
    %c0_i32_1 = arith.constant 0 : i32
    return %c0_i32, %c0_i32_0 : i32, i32
  }
  func.func @transform_7(%arg0: i32) -> (i32, i32) {
    %c0_i32 = arith.constant 0 : i32
    %c0_i32_0 = arith.constant 0 : i32
    %c0_i32_1 = arith.constant 0 : i32
    return %c0_i32, %c0_i32_0 : i32, i32
  }
  func.func @transform_8(%arg0: i32) -> (i32, i32) {
    %c0_i32 = arith.constant 0 : i32
    %c0_i32_0 = arith.constant 0 : i32
    %c0_i32_1 = arith.constant 0 : i32
    return %c0_i32, %c0_i32_0 : i32, i32
  }
  func.func @transform_9(%arg0: i32) -> (i32, i32) {
    %c0_i32 = arith.constant 0 : i32
    %c0_i32_0 = arith.constant 0 : i32
    return %arg0, %c0_i32 : i32, i32
  }
}

</mosaic_0001>

<llo_original>
// kernel: tpu_custom_call.1
$region0: #{tpu_custom_call.1}
  #allocation0 [shape = 'u32[]', space=smem, size = 0x4, offset = 0x4, fixed_abs, tag = 'smem constant byte address 0x4 - core index']
  #allocation1 [shape = 'u32[72,128]{1,0:T(1,128)}', space=vmem, size = 0x9000, scoped, tag = 'internal scratch']
  %s0 = inlined_call_operand.vmem [shape: f32[16,16], index: 0, kind: input, shape index: {}]
  %s1 = inlined_call_operand.vmem [shape: f32[16,32], index: 1, kind: input, shape index: {}]
  %s2 = inlined_call_operand.vmem [shape: f32[1,32], index: 2, kind: input, shape index: {}]
  %s3 = inlined_call_operand.vmem [shape: f32[32,32], index: 3, kind: input, shape index: {}]
  %s4 = inlined_call_operand.vmem [shape: f32[1,32], index: 4, kind: input, shape index: {}]
  %s5 = inlined_call_operand.vmem [shape: f32[128,32], index: 5, kind: input, shape index: {}]
  %s6 = inlined_call_operand.vmem [shape: f32[1,32], index: 6, kind: input, shape index: {}]
  %s7 = inlined_call_operand.vmem [shape: f32[32,4], index: 7, kind: input, shape index: {}]
  %s8 = inlined_call_operand.vmem [shape: f32[1,4], index: 8, kind: input, shape index: {}]
  %s9 = inlined_call_operand.hbm [shape: f32[2,4], index: 9, kind: output, shape index: {}]
  %s10 = sld [smem:[#allocation0]]
  $region46: #{tpu_custom_call.1} parent=0
    _
  %s12 = ssub.s32 1, %s10
  %s13 = scalar_select 0, %s12, %s10
  $region1: #{tpu_custom_call.1} parent=0
    #allocation2 [shape = 'u8[1024]{0}', space=vmem, size = 0x400, scoped, tag = 'output window, operand 0, single buffered']
    #allocation3 [shape = 's32[1]{0}', space=sflag, size = 0x4, scoped, tag = 'scoped memory for tpu_custom_call.1']
    %14 = vsyncpa [#allocation3], 0
    // Predicated region
    $region2: #{tpu_custom_call.1} parent=1 // pred_check
      _
    $region3: #{tpu_custom_call.1} parent=1 // pred_check_branch
      %16 = sbr.rel (0) target = $region5
    $region4: #{tpu_custom_call.1} parent=1 // pred_region
      _
    $region5: #{tpu_custom_call.1} parent=1 // pred_fallthru
      _
    // Predicated region
    $region6: #{tpu_custom_call.1} parent=1 // pred_check
      _
    $region7: #{tpu_custom_call.1} parent=1 // pred_check_branch
      %18 = sbr.rel (0) target = $region9
    $region8: #{tpu_custom_call.1} parent=1 // pred_region
      _
    $region9: #{tpu_custom_call.1} parent=1 // pred_fallthru
      _
    // Predicated region
    $region10: #{tpu_custom_call.1} parent=1 // pred_check
      _
    $region11: #{tpu_custom_call.1} parent=1 // pred_check_branch
      %20 = sbr.rel (0) target = $region13
    $region12: #{tpu_custom_call.1} parent=1 // pred_region
      _
    $region13: #{tpu_custom_call.1} parent=1 // pred_fallthru
      _
    // Predicated region
    $region14: #{tpu_custom_call.1} parent=1 // pred_check
      _
    $region15: #{tpu_custom_call.1} parent=1 // pred_check_branch
      %22 = sbr.rel (0) target = $region17
    $region16: #{tpu_custom_call.1} parent=1 // pred_region
      _
    $region17: #{tpu_custom_call.1} parent=1 // pred_fallthru
      _
    // Predicated region
    $region18: #{tpu_custom_call.1} parent=1 // pred_check
      _
    $region19: #{tpu_custom_call.1} parent=1 // pred_check_branch
      %24 = sbr.rel (0) target = $region21
    $region20: #{tpu_custom_call.1} parent=1 // pred_region
      _
    $region21: #{tpu_custom_call.1} parent=1 // pred_fallthru
      _
    // Predicated region
    $region22: #{tpu_custom_call.1} parent=1 // pred_check
      _
    $region23: #{tpu_custom_call.1} parent=1 // pred_check_branch
      %26 = sbr.rel (0) target = $region25
    $region24: #{tpu_custom_call.1} parent=1 // pred_region
      _
    $region25: #{tpu_custom_call.1} parent=1 // pred_fallthru
      _
    // Predicated region
    $region26: #{tpu_custom_call.1} parent=1 // pred_check
      _
    $region27: #{tpu_custom_call.1} parent=1 // pred_check_branch
      %28 = sbr.rel (0) target = $region29
    $region28: #{tpu_custom_call.1} parent=1 // pred_region
      _
    $region29: #{tpu_custom_call.1} parent=1 // pred_fallthru
      _
    // Predicated region
    $region30: #{tpu_custom_call.1} parent=1 // pred_check
      _
    $region31: #{tpu_custom_call.1} parent=1 // pred_check_branch
      %30 = sbr.rel (0) target = $region33
    $region32: #{tpu_custom_call.1} parent=1 // pred_region
      _
    $region33: #{tpu_custom_call.1} parent=1 // pred_fallthru
      _
    // Predicated region
    $region34: #{tpu_custom_call.1} parent=1 // pred_check
      _
    $region35: #{tpu_custom_call.1} parent=1 // pred_check_branch
      %32 = sbr.rel (0) target = $region37
    $region36: #{tpu_custom_call.1} parent=1 // pred_region
      _
    $region37: #{tpu_custom_call.1} parent=1 // pred_fallthru
      _
    %v33 = vld [vmem:[%s0] sm:$0xff]
    %v34 = vld [vmem:[%s0 + $0x8] sm:$0xff]
    %v35 = vld [vmem:[%s1] sm:$0xff]
    %v36 = vld [vmem:[%s1 + $0x8] sm:$0xff]
    %v37 = vld [vmem:[%s2] sm:$0x1]
    %v39 = vperm.slane %v37, 0
    %vm41 = vcmask 130048
    %v43 = vsel %vm41, %v33, 0
    %v46 = vsel %vm41, %v34, 0
    %48 = vmatpush.msra.mxu0 0.0
    %49 = vmatpush.msra.mxu0 0.0
    %50 = vmatpush.msra.mxu0 0.0
    %51 = vmatpush.msra.mxu0 0.0
    %52 = vmatpush.msra.mxu0 0.0
    %53 = vmatpush.msra.mxu0 0.0
    %54 = vmatpush.msra.mxu0 0.0
    %55 = vmatpush.msra.mxu0 0.0
    %56 = vmatpush.msra.mxu0 0.0
    %57 = vmatpush.msra.mxu0 0.0
    %58 = vmatpush.msra.mxu0 0.0
    %59 = vmatpush.msra.mxu0 0.0
    %60 = vmatpush.msra.mxu0 0.0
    %61 = vmatpush.msra.mxu0 0.0
    %62 = vmatpush.msra.mxu0 %v36
    %63 = vmatpush.msra.mxu0 %v35
    %64 = vmatmul.f32.gmra.mxu0 %v43
    %v65 = vpop.f32.mrf.mxu0
    %v66 = vadd.f32 %v39, %v65
    %67 = vmatmul.f32.gmra.mxu0 %v46
    %v68 = vpop.f32.mrf.mxu0
    %v69 = vadd.f32 %v39, %v68
    %70 = vdwg.mxu0
    %v71 = vmax.f32 %v66, 0.0
    %v72 = vmax.f32 %v69, 0.0
    %v73 = vld [vmem:[%s3] sm:$0xff]
    %v74 = vld [vmem:[%s3 + $0x8] sm:$0xff]
    %v75 = vld [vmem:[%s3 + $0x10] sm:$0xff]
    %v76 = vld [vmem:[%s3 + $0x18] sm:$0xff]
    %v77 = vld [vmem:[%s4] sm:$0x1]
    %v79 = vperm.slane %v77, 0
    %vm81 = vcmask 261120
    %v83 = vsel %vm81, %v71, 0
    %v86 = vsel %vm81, %v72, 0
    %88 = vmatpush.msra.mxu0 0.0
    %89 = vmatpush.msra.mxu0 0.0
    %90 = vmatpush.msra.mxu0 0.0
    %91 = vmatpush.msra.mxu0 0.0
    %92 = vmatpush.msra.mxu0 0.0
    %93 = vmatpush.msra.mxu0 0.0
    %94 = vmatpush.msra.mxu0 0.0
    %95 = vmatpush.msra.mxu0 0.0
    %96 = vmatpush.msra.mxu0 0.0
    %97 = vmatpush.msra.mxu0 0.0
    %98 = vmatpush.msra.mxu0 0.0
    %99 = vmatpush.msra.mxu0 0.0
    %100 = vmatpush.msra.mxu0 %v76
    %101 = vmatpush.msra.mxu0 %v75
    %102 = vmatpush.msra.mxu0 %v74
    %103 = vmatpush.msra.mxu0 %v73
    %104 = vmatmul.f32.gmra.mxu0 %v83
    %v105 = vpop.f32.mrf.mxu0
    %v106 = vadd.f32 %v79, %v105
    %107 = vmatmul.f32.gmra.mxu0 %v86
    %v108 = vpop.f32.mrf.mxu0
    %v109 = vadd.f32 %v79, %v108
    %110 = vdwg.mxu0
    %v111 = vmax.f32 %v106, 0.0
    %v112 = vmax.f32 %v109, 0.0
    %v113 = vsel %vm81, %v111, 0.0
    %v114 = vrot.slane %v113, 4
    %v115 = vadd.f32 %v113, %v114
    %v116 = vrot.slane %v115, 2
    %v117 = vadd.f32 %v115, %v116
    %v118 = vrot.slane %v117, 1
    %v119 = vadd.f32 %v117, %v118
    %v120 = vsel %vm81, %v112, 0.0
    %v121 = vrot.slane %v120, 4
    %v122 = vadd.f32 %v120, %v121
    %v123 = vrot.slane %v122, 2
    %v124 = vadd.f32 %v122, %v123
    %v125 = vrot.slane %v124, 1
    %v126 = vadd.f32 %v124, %v125
    %v127 = vrcp.pop 8.0
    %v128 = vmul.f32 8.0, %v127
    %v129 = vsub.f32 1.0, %v128
    %v130 = vmul.f32 %v127, %v129
    %v131 = vadd.f32 %v127, %v130
    %vm132 = vweird.f32 %v127
    %v133 = vsel %vm132, %v127, %v131
    %v134 = vmul.f32 %v119, %v133
    %v135 = vmul.f32 %v126, %v133
    %v136 = vsel %vm81, %v111, -inf
    %v137 = vrot.slane %v136, 4
    %v138 = vmax.f32 %v136, %v137
    %v139 = vrot.slane %v138, 2
    %v140 = vmax.f32 %v138, %v139
    %v141 = vrot.slane %v140, 1
    %v142 = vmax.f32 %v140, %v141
    %v143 = vsel %vm81, %v112, -inf
    %v144 = vrot.slane %v143, 4
    %v145 = vmax.f32 %v143, %v144
    %v146 = vrot.slane %v145, 2
    %v147 = vmax.f32 %v145, %v146
    %v148 = vrot.slane %v147, 1
    %v149 = vmax.f32 %v147, %v148
    %v152 = vrot.slane %v112, 7
    %157 = vrot.lane.b32.xlu0 %v134, 32
    %v158 = vpop.permute.xlu0 %157
    %159 = vrot.lane.b32.xlu0 %v135, 32
    %v160 = vpop.permute.xlu0 %159
    %165 = vrot.lane.b32.xlu0 %v142, 64
    %v166 = vpop.permute.xlu0 %165
    %167 = vrot.lane.b32.xlu0 %v149, 64
    %v168 = vpop.permute.xlu0 %167
    %171 = vrot.lane.b32.xlu0 %v134, 96
    %v172 = vpop.permute.xlu0 %171
    %173 = vrot.lane.b32.xlu0 %v135, 96
    %v174 = vpop.permute.xlu0 %173
    %v177 = vsel %vm81, %v111, %v158
    %v178 = vsel %vm81, %v152, %v160
    %vm179 = vcmask 523264
    %v180 = vsel %vm179, %v177, %v166
    %v181 = vsel %vm179, %v178, %v168
    %vm182 = vcmask 785408
    %v183 = vsel %vm182, %v180, %v172
    %v184 = vsel %vm182, %v181, %v174
    %v185 = vld [vmem:[%s5] sm:$0xff]
    %v186 = vld [vmem:[%s5 + $0x8] sm:$0xff]
    %v187 = vld [vmem:[%s5 + $0x10] sm:$0xff]
    %v188 = vld [vmem:[%s5 + $0x18] sm:$0xff]
    %v189 = vld [vmem:[%s5 + $0x20] sm:$0xff]
    %v190 = vld [vmem:[%s5 + $0x28] sm:$0xff]
    %v191 = vld [vmem:[%s5 + $0x30] sm:$0xff]
    %v192 = vld [vmem:[%s5 + $0x38] sm:$0xff]
    %v193 = vld [vmem:[%s5 + $0x40] sm:$0xff]
    %v194 = vld [vmem:[%s5 + $0x48] sm:$0xff]
    %v195 = vld [vmem:[%s5 + $0x50] sm:$0xff]
    %v196 = vld [vmem:[%s5 + $0x58] sm:$0xff]
    %v197 = vld [vmem:[%s5 + $0x60] sm:$0xff]
    %v198 = vld [vmem:[%s5 + $0x68] sm:$0xff]
    %v199 = vld [vmem:[%s5 + $0x70] sm:$0xff]
    %v200 = vld [vmem:[%s5 + $0x78] sm:$0xff]
    %v201 = vld [vmem:[%s6] sm:$0x1]
    %v203 = vperm.slane %v201, 0
    %vm207 = vcmask 1040384
    %v208 = vrot.slane %v183, 7
    %v209 = vrot.slane %v184, 7
    %v210 = vsel %vm207, %v208, %v209
    %212 = vmatpush.msra.mxu0 %v200
    %213 = vmatpush.msra.mxu0 %v199
    %214 = vmatpush.msra.mxu0 %v198
    %215 = vmatpush.msra.mxu0 %v197
    %216 = vmatpush.msra.mxu0 %v196
    %217 = vmatpush.msra.mxu0 %v195
    %218 = vmatpush.msra.mxu0 %v194
    %219 = vmatpush.msra.mxu0 %v193
    %220 = vmatpush.msra.mxu0 %v192
    %221 = vmatpush.msra.mxu0 %v191
    %222 = vmatpush.msra.mxu0 %v190
    %223 = vmatpush.msra.mxu0 %v189
    %224 = vmatpush.msra.mxu0 %v188
    %225 = vmatpush.msra.mxu0 %v187
    %226 = vmatpush.msra.mxu0 %v186
    %227 = vmatpush.msra.mxu0 %v185
    %228 = vmatmul.f32.gmra.mxu0 %v210
    %v229 = vpop.f32.mrf.mxu0
    %v230 = vadd.f32 %v203, %v229
    %231 = vdwg.mxu0
    %v232 = vmax.f32 %v230, 0.0
    %v233 = vld [vmem:[%s7] sm:$0xff]
    %v234 = vld [vmem:[%s7 + $0x8] sm:$0xff]
    %v235 = vld [vmem:[%s7 + $0x10] sm:$0xff]
    %v236 = vld [vmem:[%s7 + $0x18] sm:$0xff]
    %v237 = vld [vmem:[%s8] sm:$0x1]
    %v239 = vperm.slane %v237, 0
    %v242 = vsel %vm81, %v232, 0
    %244 = vmatpush.msra.mxu0 0.0
    %245 = vmatpush.msra.mxu0 0.0
    %246 = vmatpush.msra.mxu0 0.0
    %247 = vmatpush.msra.mxu0 0.0
    %248 = vmatpush.msra.mxu0 0.0
    %249 = vmatpush.msra.mxu0 0.0
    %250 = vmatpush.msra.mxu0 0.0
    %251 = vmatpush.msra.mxu0 0.0
    %252 = vmatpush.msra.mxu0 0.0
    %253 = vmatpush.msra.mxu0 0.0
    %254 = vmatpush.msra.mxu0 0.0
    %255 = vmatpush.msra.mxu0 0.0
    %256 = vmatpush.msra.mxu0 %v236
    %257 = vmatpush.msra.mxu0 %v235
    %258 = vmatpush.msra.mxu0 %v234
    %259 = vmatpush.msra.mxu0 %v233
    %260 = vmatmul.f32.gmra.mxu0 %v242
    %v261 = vpop.f32.mrf.mxu0
    %v262 = vadd.f32 %v239, %v261
    %263 = vdwg.mxu0
    %v264 = vtanh.pop %v262
    %vm265 = vcmask 25600
    %266 = vst.msk [vmem:[#allocation2] sm:$0x3] %vm265, %v264
    // Predicated region
    $region38: #{tpu_custom_call.1} parent=1 // pred_check
      _
    $region39: #{tpu_custom_call.1} parent=1 // pred_check_branch
      %268 = sbr.rel (0) target = $region41
    $region40: #{tpu_custom_call.1} parent=1 // pred_region
      %270 = vsyncadd [#allocation3], 0
      %s272 = sshll.u32 [#allocation2], 4
      %s273 = int_to_ptr.vmem [resolvable:$true] %s272
      %s274 = sshll.u32 %s9, 4
      %s275 = int_to_ptr.hbm [resolvable:$true] %s274
      %277 = dma.vmem_to_hbm [thread:$0]  %s273, 32, %s275, [#allocation3]
    $region41: #{tpu_custom_call.1} parent=1 // pred_fallthru
      _
    // Predicated region
    $region42: #{tpu_custom_call.1} parent=1 // pred_check
      _
    $region43: #{tpu_custom_call.1} parent=1 // pred_check_branch
      %279 = sbr.rel (0) target = $region45
    $region44: #{tpu_custom_call.1} parent=1 // pred_region
      %281 = dma.done [#allocation3], 32
    $region45: #{tpu_custom_call.1} parent=1 // pred_fallthru
      _
    %282 = vsyncpa [#allocation3], 1

</llo_original>
